<compile_context>
chip_gen: v6e
topology: v6e:2x2x1
jax: 0.10.0
libtpu: 0.0.40
codegen_flags: <defaults>
</compile_context>

<pallas_src>
import jax
import jax.numpy as jnp
from jax.experimental import pallas as pl
from jax.experimental.pallas import tpu as pltpu


def polarnet_kernel(x_ref, w1_ref, b1_ref, w2_ref, b2_ref, out_ref, hid_ref):
    # x_ref: (2, TILE_N)  -- row 0 = x coords, row 1 = y coords
    xc = x_ref[0:1, :]                                   # (1, TILE_N)
    yc = x_ref[1:2, :]                                   # (1, TILE_N)

    # cartesian -> polar (r, theta), same per-element math as the torch loop
    r = jnp.sqrt(xc * xc + yc * yc)                      # (1, TILE_N)
    theta = jnp.arctan2(yc, xc)                          # (1, TILE_N)

    # layer 1: K == 2, so two broadcasted multiplies on the VPU.
    w1 = w1_ref[...]                                     # (H, 2)   torch layout
    b1 = b1_ref[...]                                     # (H, 1)
    pre1 = w1[:, 0:1] * r + w1[:, 1:2] * theta + b1      # (H, TILE_N)
    hid = jnp.tanh(pre1)                                 # (H, TILE_N)
    hid_ref[...] = hid                                   # lane-dense store

    # layer 2: single output column -> VPU multiply + sublane (XLU) reduce,
    # no MXU involvement.
    pre2 = jnp.sum(hid * w2_ref[...], axis=0, keepdims=True) + b2_ref[...]  # (1, TILE_N)
    out_ref[...] = jax.nn.sigmoid(pre2)                  # (1, TILE_N)


def polarnet_forward(x, w1, b1, w2, b2, block_n=2048):
    """x: (N, 2) f32.  w1: (H, 2), b1: (H,), w2: (1, H), b2: (1,)  (torch nn.Linear layout).

    Returns (out (N, 1), hid (N, H)) matching PolarNet.forward / self.hid1.
    """
    n = x.shape[0]
    h = w1.shape[0]

    # Lane-dense tile over N (multiple of 128); don't over-pad tiny batches.
    n_up128 = ((n + 127) // 128) * 128
    block_n = max(128, min(((block_n + 127) // 128) * 128, n_up128))
    n_pad = pl.cdiv(n, block_n) * block_n

    # Wrapper-side layout plumbing: N onto the lane axis, zero-pad the tail
    # (atan2(0,0) == 0 in JAX, so padding is NaN-free).
    x_t = jnp.zeros((2, n_pad), jnp.float32).at[:, :n].set(x.T.astype(jnp.float32))
    b1k = b1.reshape(h, 1).astype(jnp.float32)
    w2k = w2.reshape(h, 1).astype(jnp.float32)
    b2k = b2.reshape(1, 1).astype(jnp.float32)
    w1k = w1.astype(jnp.float32)

    grid = (n_pad // block_n,)
    const = lambda i: (0, 0)   # weights/biases: DMA once, VMEM-resident across grid

    out_t, hid_t = pl.pallas_call(
        polarnet_kernel,
        out_shape=(
            jax.ShapeDtypeStruct((1, n_pad), jnp.float32),   # sigmoid output, lane-dense
            jax.ShapeDtypeStruct((h, n_pad), jnp.float32),   # hid1 (tanh), lane-dense
        ),
        grid=grid,
        in_specs=[
            pl.BlockSpec((2, block_n), lambda i: (0, i)),    # x tile
            pl.BlockSpec((h, 2), const),                     # w1
            pl.BlockSpec((h, 1), const),                     # b1
            pl.BlockSpec((h, 1), const),                     # w2
            pl.BlockSpec((1, 1), const),                     # b2
        ],
        out_specs=(
            pl.BlockSpec((1, block_n), lambda i: (0, i)),
            pl.BlockSpec((h, block_n), lambda i: (0, i)),
        ),
        compiler_params=pltpu.CompilerParams(
            dimension_semantics=("parallel",),               # megacore on v7x; no-op v5e/v6e
        ),
    )(x_t, w1k, b1k, w2k, b2k)

    # Back to the module's (N, 1) / (N, H) views, dropping padding.
    out = out_t[:, :n].T
    hid = hid_t[:, :n].T
    return out, hid


if __name__ == "__main__":
    N = 8          # batch of (x, y) points
    NUM_HID = 32   # hidden width

    key = jax.random.PRNGKey(0)
    k_x, k_w1, k_b1, k_w2, k_b2 = jax.random.split(key, 5)

    # deterministic synthetic input and parameters (torch Linear-style uniform init)
    x = jax.random.normal(k_x, (N, 2), dtype=jnp.float32)

    bound1 = 1.0 / jnp.sqrt(2.0)
    w1 = jax.random.uniform(k_w1, (NUM_HID, 2), jnp.float32, -bound1, bound1)   # torch layout
    b1 = jax.random.uniform(k_b1, (NUM_HID,), jnp.float32, -bound1, bound1)

    bound2 = 1.0 / jnp.sqrt(float(NUM_HID))
    w2 = jax.random.uniform(k_w2, (1, NUM_HID), jnp.float32, -bound2, bound2)   # torch layout
    b2 = jax.random.uniform(k_b2, (1,), jnp.float32, -bound2, bound2)

    out, hid = polarnet_forward(x, w1, b1, w2, b2)
    jax.block_until_ready((out, hid))

    # reference check in plain JAX (nn.Linear semantics with torch-layout weights)
    r = jnp.sqrt(x[:, 0:1] ** 2 + x[:, 1:2] ** 2)
    theta = jnp.arctan2(x[:, 1:2], x[:, 0:1])
    polar = jnp.concatenate([r, theta], axis=1)                  # (N, 2)
    hid_ref = jnp.tanh(polar @ w1.T + b1[None, :])               # (N, H)
    out_ref = jax.nn.sigmoid(hid_ref @ w2.T + b2[None, :])       # (N, 1)
    assert jnp.allclose(out, out_ref, atol=1e-5), "output mismatch"
    assert jnp.allclose(hid, hid_ref, atol=1e-5), "hidden mismatch"

    print("KERNEL_OK")
</pallas_src>

<mosaic_0001>
module attributes {stable_mosaic.version = 11 : i64} {
  func.func @polarnet_kernel(%arg0: i32, %arg1: memref<2x128xf32, #tpu.memory_space<vmem>>, %arg2: memref<32x2xf32, #tpu.memory_space<vmem>>, %arg3: memref<32x1xf32, #tpu.memory_space<vmem>>, %arg4: memref<32x1xf32, #tpu.memory_space<vmem>>, %arg5: memref<1x1xf32, #tpu.memory_space<vmem>>, %arg6: memref<1x128xf32, #tpu.memory_space<vmem>>, %arg7: memref<32x128xf32, #tpu.memory_space<vmem>>) attributes {dimension_semantics = [#tpu.dimension_semantics<parallel>], iteration_bounds = array<i64: 1>, scalar_prefetch = 0 : i64, scratch_operands = 0 : i64, tpu.core_type = #tpu.core_type<tc>, window_params = [{transform_indices = @transform_0, window_bounds = array<i64: 2, 128>}, {pipeline_mode = #tpu.pipeline_mode<synchronous>, transform_indices = @transform_1, window_bounds = array<i64: 32, 2>}, {pipeline_mode = #tpu.pipeline_mode<synchronous>, transform_indices = @transform_2, window_bounds = array<i64: 32, 1>}, {pipeline_mode = #tpu.pipeline_mode<synchronous>, transform_indices = @transform_3, window_bounds = array<i64: 32, 1>}, {pipeline_mode = #tpu.pipeline_mode<synchronous>, transform_indices = @transform_4, window_bounds = array<i64: 1, 1>}, {transform_indices = @transform_5, window_bounds = array<i64: 1, 128>}, {transform_indices = @transform_6, window_bounds = array<i64: 32, 128>}]} {
    %c0 = arith.constant 0 : index
    %c0_0 = arith.constant 0 : index
    %0 = vector.load %arg1[%c0, %c0_0] : memref<2x128xf32, #tpu.memory_space<vmem>>, vector<1x128xf32>
    %c1 = arith.constant 1 : index
    %c0_1 = arith.constant 0 : index
    %1 = vector.load %arg1[%c1, %c0_1] : memref<2x128xf32, #tpu.memory_space<vmem>>, vector<1x128xf32>
    %2 = arith.mulf %0, %0 : vector<1x128xf32>
    %3 = arith.mulf %1, %1 : vector<1x128xf32>
    %4 = arith.addf %2, %3 : vector<1x128xf32>
    %5 = math.sqrt %4 : vector<1x128xf32>
    %6 = math.atan2 %1, %0 : vector<1x128xf32>
    %c0_2 = arith.constant 0 : index
    %c0_3 = arith.constant 0 : index
    %7 = vector.load %arg2[%c0_2, %c0_3] : memref<32x2xf32, #tpu.memory_space<vmem>>, vector<32x2xf32>
    %c0_4 = arith.constant 0 : index
    %c0_5 = arith.constant 0 : index
    %8 = vector.load %arg3[%c0_4, %c0_5] : memref<32x1xf32, #tpu.memory_space<vmem>>, vector<32x1xf32>
    %9 = vector.extract_strided_slice %7 {offsets = [0, 0], sizes = [32, 1], strides = [1, 1]} : vector<32x2xf32> to vector<32x1xf32>
    %10 = vector.broadcast %9 : vector<32x1xf32> to vector<32x128xf32>
    %11 = vector.broadcast %5 : vector<1x128xf32> to vector<32x128xf32>
    %12 = arith.mulf %10, %11 : vector<32x128xf32>
    %13 = vector.extract_strided_slice %7 {offsets = [0, 1], sizes = [32, 1], strides = [1, 1]} : vector<32x2xf32> to vector<32x1xf32>
    %14 = vector.broadcast %13 : vector<32x1xf32> to vector<32x128xf32>
    %15 = vector.broadcast %6 : vector<1x128xf32> to vector<32x128xf32>
    %16 = arith.mulf %14, %15 : vector<32x128xf32>
    %17 = arith.addf %12, %16 : vector<32x128xf32>
    %18 = vector.broadcast %8 : vector<32x1xf32> to vector<32x128xf32>
    %19 = arith.addf %17, %18 : vector<32x128xf32>
    %20 = math.tanh %19 : vector<32x128xf32>
    %c0_6 = arith.constant 0 : index
    %c0_7 = arith.constant 0 : index
    %21 = vector.load %arg7[%c0_6, %c0_7] : memref<32x128xf32, #tpu.memory_space<vmem>>, vector<32x128xf32>
    tpu.vector_store %arg7[%c0_6, %c0_7], %20 {strides = array<i32>} : memref<32x128xf32, #tpu.memory_space<vmem>>, vector<32x128xf32>,
    %c0_8 = arith.constant 0 : index
    %c0_9 = arith.constant 0 : index
    %22 = vector.load %arg4[%c0_8, %c0_9] : memref<32x1xf32, #tpu.memory_space<vmem>>, vector<32x1xf32>
    %23 = vector.broadcast %22 : vector<32x1xf32> to vector<32x128xf32>
    %24 = arith.mulf %20, %23 : vector<32x128xf32>
    %cst = arith.constant dense<0.000000e+00> : vector<128xf32>
    %25 = vector.multi_reduction <add>, %24, %cst [0] : vector<32x128xf32> to vector<128xf32>
    %26 = vector.shape_cast %25 : vector<128xf32> to vector<1x128xf32>
    %c0_10 = arith.constant 0 : index
    %c0_11 = arith.constant 0 : index
    %27 = vector.load %arg5[%c0_10, %c0_11] : memref<1x1xf32, #tpu.memory_space<vmem>>, vector<1x1xf32>
    %28 = vector.broadcast %27 : vector<1x1xf32> to vector<1x128xf32>
    %29 = arith.addf %26, %28 : vector<1x128xf32>
    %30 = arith.negf %29 : vector<1x128xf32>
    %31 = math.exp %30 : vector<1x128xf32>
    %cst_12 = arith.constant 1.000000e+00 : f32
    %32 = vector.broadcast %cst_12 : f32 to vector<1x128xf32>
    %33 = arith.addf %32, %31 : vector<1x128xf32>
    %34 = arith.divf %32, %33 : vector<1x128xf32>
    %c0_13 = arith.constant 0 : index
    %c0_14 = arith.constant 0 : index
    %35 = vector.load %arg6[%c0_13, %c0_14] : memref<1x128xf32, #tpu.memory_space<vmem>>, vector<1x128xf32>
    tpu.vector_store %arg6[%c0_13, %c0_14], %34 {strides = array<i32>} : memref<1x128xf32, #tpu.memory_space<vmem>>, vector<1x128xf32>,
    return
  }
  func.func @transform_0(%arg0: i32) -> (i32, i32) {
    %c0_i32 = arith.constant 0 : i32
    %c0_i32_0 = arith.constant 0 : i32
    return %c0_i32, %arg0 : i32, i32
  }
  func.func @transform_1(%arg0: i32) -> (i32, i32) {
    %c0_i32 = arith.constant 0 : i32
    %c0_i32_0 = arith.constant 0 : i32
    %c0_i32_1 = arith.constant 0 : i32
    return %c0_i32, %c0_i32_0 : i32, i32
  }
  func.func @transform_2(%arg0: i32) -> (i32, i32) {
    %c0_i32 = arith.constant 0 : i32
    %c0_i32_0 = arith.constant 0 : i32
    %c0_i32_1 = arith.constant 0 : i32
    return %c0_i32, %c0_i32_0 : i32, i32
  }
  func.func @transform_3(%arg0: i32) -> (i32, i32) {
    %c0_i32 = arith.constant 0 : i32
    %c0_i32_0 = arith.constant 0 : i32
    %c0_i32_1 = arith.constant 0 : i32
    return %c0_i32, %c0_i32_0 : i32, i32
  }
  func.func @transform_4(%arg0: i32) -> (i32, i32) {
    %c0_i32 = arith.constant 0 : i32
    %c0_i32_0 = arith.constant 0 : i32
    %c0_i32_1 = arith.constant 0 : i32
    return %c0_i32, %c0_i32_0 : i32, i32
  }
  func.func @transform_5(%arg0: i32) -> (i32, i32) {
    %c0_i32 = arith.constant 0 : i32
    %c0_i32_0 = arith.constant 0 : i32
    return %c0_i32, %arg0 : i32, i32
  }
  func.func @transform_6(%arg0: i32) -> (i32, i32) {
    %c0_i32 = arith.constant 0 : i32
    %c0_i32_0 = arith.constant 0 : i32
    return %c0_i32, %arg0 : i32, i32
  }
}

</mosaic_0001>

<llo_original>
// kernel: tpu_custom_call.1
$region0: #{tpu_custom_call.1}
  #allocation0 [shape = 'u32[]', space=smem, size = 0x4, offset = 0x4, fixed_abs, tag = 'smem constant byte address 0x4 - core index']
  #allocation1 [shape = 'u32[144,128]{1,0:T(1,128)}', space=vmem, size = 0x12000, scoped, tag = 'internal scratch']
  #allocation2 [shape = 'f32[1,1]{1,0:T(1,128)S(1)}', space=vmem, size = 0x200, scoped, tag = 'scoped memory for tpu_custom_call.1']
  %s0 = inlined_call_operand.vmem [shape: f32[2,128], index: 0, kind: input, shape index: {}]
  %s1 = inlined_call_operand.vmem [shape: f32[32,2], index: 1, kind: input, shape index: {}]
  %s2 = inlined_call_operand.vmem [shape: f32[32,1], index: 2, kind: input, shape index: {}]
  %s3 = inlined_call_operand.vmem [shape: f32[32,1], index: 3, kind: input, shape index: {}]
  %s4 = inlined_call_operand.<no memory space> [shape: f32[1,1], index: 4, kind: input, shape index: {}]
  %s5 = inlined_call_operand.hbm [shape: f32[1,128], index: 5, kind: output, shape index: {0}]
  %s6 = inlined_call_operand.hbm [shape: f32[32,128], index: 6, kind: output, shape index: {1}]
  %7 = xla_tuple %s5, %s6
  %s8 = sld [smem:[#allocation0]]
  $region38: #{tpu_custom_call.1} parent=0
    _
  %s10 = ssub.s32 1, %s8
  %s11 = scalar_select 0, %s10, %s8
  %v12 = vstv %s4
  %13 = vst [vmem:[#allocation2] sm:$0x1] %v12
  $region1: #{tpu_custom_call.1} parent=0
    #allocation3 [shape = 'u8[512]{0}', space=vmem, size = 0x400, scoped, tag = 'output window, operand 0, single buffered']
    #allocation4 [shape = 's32[1]{0}', space=sflag, size = 0x4, scoped, tag = 'scoped memory for tpu_custom_call.1']
    #allocation5 [shape = 'u8[16384]{0}', space=vmem, size = 0x4000, scoped, tag = 'output window, operand 1, single buffered']
    #allocation6 [shape = 's32[1]{0}', space=sflag, size = 0x4, scoped, tag = 'scoped memory for tpu_custom_call.1']
    %14 = vsyncpa [#allocation4], 0
    %15 = vsyncpa [#allocation6], 0
    // Predicated region
    $region2: #{tpu_custom_call.1} parent=1 // pred_check
      _
    $region3: #{tpu_custom_call.1} parent=1 // pred_check_branch
      %17 = sbr.rel (0) target = $region5
    $region4: #{tpu_custom_call.1} parent=1 // pred_region
      _
    $region5: #{tpu_custom_call.1} parent=1 // pred_fallthru
      _
    // Predicated region
    $region6: #{tpu_custom_call.1} parent=1 // pred_check
      _
    $region7: #{tpu_custom_call.1} parent=1 // pred_check_branch
      %19 = sbr.rel (0) target = $region9
    $region8: #{tpu_custom_call.1} parent=1 // pred_region
      _
    $region9: #{tpu_custom_call.1} parent=1 // pred_fallthru
      _
    // Predicated region
    $region10: #{tpu_custom_call.1} parent=1 // pred_check
      _
    $region11: #{tpu_custom_call.1} parent=1 // pred_check_branch
      %21 = sbr.rel (0) target = $region13
    $region12: #{tpu_custom_call.1} parent=1 // pred_region
      _
    $region13: #{tpu_custom_call.1} parent=1 // pred_fallthru
      _
    // Predicated region
    $region14: #{tpu_custom_call.1} parent=1 // pred_check
      _
    $region15: #{tpu_custom_call.1} parent=1 // pred_check_branch
      %23 = sbr.rel (0) target = $region17
    $region16: #{tpu_custom_call.1} parent=1 // pred_region
      _
    $region17: #{tpu_custom_call.1} parent=1 // pred_fallthru
      _
    // Predicated region
    $region18: #{tpu_custom_call.1} parent=1 // pred_check
      _
    $region19: #{tpu_custom_call.1} parent=1 // pred_check_branch
      %25 = sbr.rel (0) target = $region21
    $region20: #{tpu_custom_call.1} parent=1 // pred_region
      _
    $region21: #{tpu_custom_call.1} parent=1 // pred_fallthru
      _
    %v26 = vld [vmem:[%s0] sm:$0x1]
    %v27 = vld [vmem:[%s0 + $0x1] sm:$0x1]
    %v28 = vmul.f32 %v26, %v26
    %v29 = vmul.f32 %v27, %v27
    %v30 = vadd.f32 %v28, %v29
    %v31 = vrsqrt.pop %v30
    %v32 = vmul.f32 %v30, %v31
    %vm33 = vcmp.eq.f32.partialorder %v30, inf
    %v34 = vsel %vm33, %v30, %v32
    %vm35 = vcmp.eq.f32.partialorder %v30, 0.0
    %v36 = vand.u32 %v30, 2147483648
    %v37 = vsel %vm35, %v36, %v34
    %v38 = vand.u32 2147483647, %v26
    %v39 = vand.u32 2147483647, %v27
    %v40 = vmin.f32 %v38, %v39
    %v41 = vmax.f32 %v38, %v39
    %v42 = vrcp.pop %v41
    %v43 = vmul.f32 %v40, %v42
    %v44 = vmul.f32 %v43, %v43
    %v45 = vmul.f32 0.002785687, %v44
    %v46 = vadd.f32 %v45, -0.015866
    %v47 = vmul.f32 %v46, %v44
    %v48 = vadd.f32 %v47, 0.04247222
    %v49 = vmul.f32 %v48, %v44
    %v50 = vadd.f32 %v49, -0.074975304
    %v51 = vmul.f32 %v50, %v44
    %v52 = vadd.f32 %v51, 0.1064488
    %v53 = vmul.f32 %v52, %v44
    %v54 = vadd.f32 %v53, -0.14207031
    %v55 = vmul.f32 %v54, %v44
    %v56 = vadd.f32 %v55, 0.19993454
    %v57 = vmul.f32 %v56, %v44
    %v58 = vadd.f32 %v57, -0.33333147
    %v59 = vmul.f32 %v58, %v44
    %v60 = vmul.f32 %v59, %v43
    %v61 = vadd.f32 %v60, %v43
    %vm62 = vcmp.gt.f32.partialorder %v39, %v38
    %v63 = vsub.f32 1.5707964, %v61
    %v64 = vsel %vm62, %v63, %v61
    %vm65 = vcmp.lt.f32.partialorder %v26, 0.0
    %v66 = vsub.f32 3.1415927, %v64
    %v67 = vsel %vm65, %v66, %v64
    %vm68 = vcmp.lt.s32.totalorder %v26, 0
    %v69 = vsel %vm68, 3.1415927, 0.0
    %vm70 = vcmp.eq.f32.partialorder %v27, 0.0
    %v71 = vsel %vm70, %v69, %v67
    %vm72 = vcmp.ne.f32.partialorder %v26, %v26
    %vm73 = vcmp.ne.f32.partialorder %v27, %v27
    %vm74 = vmor %vm72, %vm73
    %v75 = vsel %vm74, nan, %v71
    %vm76 = vcmp.lt.f32.partialorder %v26, 0.0
    %v77 = vsel %vm76, 2.3561945, 0.7853982
    %vm78 = vcmp.eq.s32.totalorder %v38, inf
    %vm79 = vcmp.eq.s32.totalorder %v39, inf
    %vm80 = vmand %vm78, %vm79
    %v81 = vsel %vm80, %v77, %v75
    %v82 = vand.u32 2147483647, %v81
    %v83 = vand.u32 %v27, 2147483648
    %v84 = vor.u32 %v82, %v83
    %v85 = vld [vmem:[%s1] sm:$0xff]
    %v86 = vld [vmem:[%s1 + $0x8] sm:$0xff]
    %v87 = vld [vmem:[%s1 + $0x10] sm:$0xff]
    %v88 = vld [vmem:[%s1 + $0x18] sm:$0xff]
    %v89 = vld [vmem:[%s2] sm:$0xff]
    %v90 = vld [vmem:[%s2 + $0x8] sm:$0xff]
    %v91 = vld [vmem:[%s2 + $0x10] sm:$0xff]
    %v92 = vld [vmem:[%s2 + $0x18] sm:$0xff]
    %94 = vset.pattern.permute.xlu0 0
    %95 = vperm.xlu0 %94, %v85
    %v96 = vpop.permute.xlu0 %95
    %99 = vset.pattern.permute.xlu0 0
    %100 = vperm.xlu0 %99, %v86
    %v101 = vpop.permute.xlu0 %100
    %104 = vset.pattern.permute.xlu0 0
    %105 = vperm.xlu0 %104, %v87
    %v106 = vpop.permute.xlu0 %105
    %109 = vset.pattern.permute.xlu0 0
    %110 = vperm.xlu0 %109, %v88
    %v111 = vpop.permute.xlu0 %110
    %v113 = vlaneseq
    %v114 = vshrl.u32 %v113, 7
    %v115 = vsub.s32 0, %v114
    %v116 = vrot.slane %v37, %v115
    %v117 = vmul.f32 %v96, %v116
    %v118 = vmul.f32 %v101, %v116
    %v119 = vmul.f32 %v106, %v116
    %v120 = vmul.f32 %v111, %v116
    %121 = vset.pattern.permute.xlu0 1
    %122 = vperm.xlu0 %121, %v85
    %v123 = vpop.permute.xlu0 %122
    %125 = vset.pattern.permute.xlu0 1
    %126 = vperm.xlu0 %125, %v86
    %v127 = vpop.permute.xlu0 %126
    %129 = vset.pattern.permute.xlu0 1
    %130 = vperm.xlu0 %129, %v87
    %v131 = vpop.permute.xlu0 %130
    %133 = vset.pattern.permute.xlu0 1
    %134 = vperm.xlu0 %133, %v88
    %v135 = vpop.permute.xlu0 %134
    %v137 = vlaneseq
    %v138 = vshrl.u32 %v137, 7
    %v139 = vsub.s32 0, %v138
    %v140 = vrot.slane %v84, %v139
    %v141 = vmul.f32 %v123, %v140
    %v142 = vmul.f32 %v127, %v140
    %v143 = vmul.f32 %v131, %v140
    %v144 = vmul.f32 %v135, %v140
    %v145 = vadd.f32 %v117, %v141
    %v146 = vadd.f32 %v118, %v142
    %v147 = vadd.f32 %v119, %v143
    %v148 = vadd.f32 %v120, %v144
    %150 = vset.pattern.permute.xlu0 0
    %151 = vperm.xlu0 %150, %v89
    %v152 = vpop.permute.xlu0 %151
    %155 = vset.pattern.permute.xlu0 0
    %156 = vperm.xlu0 %155, %v90
    %v157 = vpop.permute.xlu0 %156
    %160 = vset.pattern.permute.xlu0 0
    %161 = vperm.xlu0 %160, %v91
    %v162 = vpop.permute.xlu0 %161
    %165 = vset.pattern.permute.xlu0 0
    %166 = vperm.xlu0 %165, %v92
    %v167 = vpop.permute.xlu0 %166
    %v169 = vadd.f32 %v145, %v152
    %v170 = vadd.f32 %v146, %v157
    %v171 = vadd.f32 %v147, %v162
    %v172 = vadd.f32 %v148, %v167
    %v173 = vtanh.pop %v169
    %v174 = vtanh.pop %v170
    %v175 = vtanh.pop %v171
    %v176 = vtanh.pop %v172
    %177 = vst [vmem:[#allocation5] sm:$0xff] %v173
    %178 = vst [vmem:[#allocation5 + $0x8] sm:$0xff] %v174
    %179 = vst [vmem:[#allocation5 + $0x10] sm:$0xff] %v175
    %180 = vst [vmem:[#allocation5 + $0x18] sm:$0xff] %v176
    %v181 = vld [vmem:[%s3] sm:$0xff]
    %v182 = vld [vmem:[%s3 + $0x8] sm:$0xff]
    %v183 = vld [vmem:[%s3 + $0x10] sm:$0xff]
    %v184 = vld [vmem:[%s3 + $0x18] sm:$0xff]
    %186 = vset.pattern.permute.xlu0 0
    %187 = vperm.xlu0 %186, %v181
    %v188 = vpop.permute.xlu0 %187
    %191 = vset.pattern.permute.xlu0 0
    %192 = vperm.xlu0 %191, %v182
    %v193 = vpop.permute.xlu0 %192
    %196 = vset.pattern.permute.xlu0 0
    %197 = vperm.xlu0 %196, %v183
    %v198 = vpop.permute.xlu0 %197
    %201 = vset.pattern.permute.xlu0 0
    %202 = vperm.xlu0 %201, %v184
    %v203 = vpop.permute.xlu0 %202
    %v205 = vmul.f32 %v173, %v188
    %v206 = vmul.f32 %v174, %v193
    %v207 = vmul.f32 %v175, %v198
    %v208 = vmul.f32 %v176, %v203
    %v209 = vadd.f32 %v205, %v206
    %v210 = vadd.f32 %v209, %v207
    %v211 = vadd.f32 %v210, %v208
    %v212 = vrot.slane %v211, 4
    %v213 = vadd.f32 %v211, %v212
    %v214 = vrot.slane %v213, 2
    %v215 = vadd.f32 %v213, %v214
    %v216 = vrot.slane %v215, 1
    %v217 = vadd.f32 %v215, %v216
    %v218 = vld [vmem:[#allocation2] sm:$0x1]
    %220 = vset.pattern.permute.xlu0 0
    %221 = vperm.xlu0 %220, %v218
    %v222 = vpop.permute.xlu0 %221
    %v224 = vlaneseq
    %v225 = vshrl.u32 %v224, 7
    %v226 = vsub.s32 0, %v225
    %v227 = vrot.slane %v222, %v226
    %v228 = vadd.f32 %v217, %v227
    %v229 = vxor.u32 %v228, 2147483648
    %v230 = vmul.f32 %v229, 1.442695
    %v231 = vpow.pop %v230
    %v232 = vadd.f32 %v231, 1.0
    %v233 = vrcp.pop %v232
    %v234 = vmul.f32 1.0, %v233
    %235 = vst [vmem:[#allocation3] sm:$0x1] %v234
    // Predicated region
    $region22: #{tpu_custom_call.1} parent=1 // pred_check
      _
    $region23: #{tpu_custom_call.1} parent=1 // pred_check_branch
      %237 = sbr.rel (0) target = $region25
    $region24: #{tpu_custom_call.1} parent=1 // pred_region
      %s239 = ssub.s32 16, 16
      %240 = vsyncadd [#allocation4], %s239
      %s242 = sshll.u32 [#allocation3], 4
      %s243 = int_to_ptr.vmem [resolvable:$true] %s242
      %245 = dma.vmem_to_hbm [thread:$0]  %s243, 16, %s5, [#allocation4]
    $region25: #{tpu_custom_call.1} parent=1 // pred_fallthru
      _
    // Predicated region
    $region26: #{tpu_custom_call.1} parent=1 // pred_check
      _
    $region27: #{tpu_custom_call.1} parent=1 // pred_check_branch
      %247 = sbr.rel (0) target = $region29
    $region28: #{tpu_custom_call.1} parent=1 // pred_region
      %s249 = ssub.s32 512, 512
      %250 = vsyncadd [#allocation6], %s249
      %s251 = sshll.u32 [#allocation5], 4
      %s252 = int_to_ptr.vmem [resolvable:$true] %s251
      %257 = dma.vmem_to_hbm [thread:$0]  %s252, 512, %s6, [#allocation6], 128, 128, 8
    $region29: #{tpu_custom_call.1} parent=1 // pred_fallthru
      _
    // Predicated region
    $region30: #{tpu_custom_call.1} parent=1 // pred_check
      _
    $region31: #{tpu_custom_call.1} parent=1 // pred_check_branch
      %259 = sbr.rel (0) target = $region33
    $region32: #{tpu_custom_call.1} parent=1 // pred_region
      %260 = dma.done [#allocation4], 16
    $region33: #{tpu_custom_call.1} parent=1 // pred_fallthru
      _
    // Predicated region
    $region34: #{tpu_custom_call.1} parent=1 // pred_check
      _
    $region35: #{tpu_custom_call.1} parent=1 // pred_check_branch
      %262 = sbr.rel (0) target = $region37
    $region36: #{tpu_custom_call.1} parent=1 // pred_region
      %263 = dma.done [#allocation6], 512
    $region37: #{tpu_custom_call.1} parent=1 // pred_fallthru
      _
    %264 = vsyncpa [#allocation4], 1
    %265 = vsyncpa [#allocation6], 1

</llo_original>
